<compile_context>
chip_gen: v7x
topology: tpu7x:2x2x1
jax: 0.10.0
libtpu: 0.0.40
codegen_flags: <defaults>
</compile_context>

<pallas_src>
import functools

import jax
import jax.numpy as jnp
from jax.experimental import pallas as pl
from jax.experimental.pallas import tpu as pltpu


def _l2_loss_kernel(o_ref, t_ref, out_ref, acc_ref, *, hw128, t_rows, need_mask):
    j = pl.program_id(1)            # pixel-row tile index (reduction axis, innermost)
    last = pl.num_programs(1) - 1

    @pl.when(j == 0)
    def _():
        acc_ref[...] = jnp.zeros_like(acc_ref)

    # (bn, c, T, 128) difference tile.  For bf16 inputs do the subtract/square in
    # bf16 (free on v6e/v7x VPU) and accumulate the channel sum in f32; otherwise
    # upcast to f32 first.
    if o_ref.dtype == jnp.bfloat16:
        d = o_ref[...] - t_ref[...]
        ssq = jnp.sum((d * d).astype(jnp.float32), axis=1)      # (bn, T, 128)
    else:
        d = o_ref[...].astype(jnp.float32) - t_ref[...].astype(jnp.float32)
        ssq = jnp.sum(d * d, axis=1)                             # (bn, T, 128)

    # Per-pixel L2 norm over channels; dense (bn, T, 128) tiles.
    norms = jnp.sqrt(ssq)

    if need_mask:
        # Only the last pixel-row tile is ragged; gate the mask to it so the
        # iota/compare/where filler is not paid on every step.
        @pl.when(j != last)
        def _():
            acc_ref[...] = acc_ref[...] + norms

        @pl.when(j == last)
        def _():
            row = jax.lax.broadcasted_iota(jnp.int32, norms.shape, 1)
            valid = (j * t_rows + row) < hw128
            # where-after-sqrt also zeroes NaN/Inf from edge-block padding garbage.
            acc_ref[...] = acc_ref[...] + jnp.where(valid, norms, 0.0)
    else:
        acc_ref[...] = acc_ref[...] + norms

    @pl.when(j == last)
    def _():
        # Single cross-lane/sublane reduction per batch block.
        out_ref[...] = jnp.sum(acc_ref[...]).reshape(1, 1, 1)


def l2_loss(output, target):
    """Pallas implementation of L2().forward(output, target)."""
    assert output.shape == target.shape
    n, c, h, w = output.shape
    hw = h * w
    total = n * hw
    itemsize = jnp.dtype(output.dtype).itemsize

    # --- pixel layout: (n, c, hw128, 128), zero-padding the ragged tail ---------
    hw_pad = pl.cdiv(hw, 128) * 128
    o3 = output.reshape(n, c, hw)
    t3 = target.reshape(n, c, hw)
    if hw_pad != hw:
        # zero diff -> zero norm -> contributes 0 to the sum; mean divides by n*hw.
        pad = ((0, 0), (0, 0), (0, hw_pad - hw))
        o3 = jnp.pad(o3, pad)
        t3 = jnp.pad(t3, pad)
    hw128 = hw_pad // 128
    o4 = o3.reshape(n, c, hw128, 128)
    t4 = t3.reshape(n, c, hw128, 128)

    # --- generation-aware VMEM budget -------------------------------------------
    try:
        vmem_cap = int(pltpu.get_tpu_info().vmem_capacity_bytes)
    except Exception:
        vmem_cap = 64 * 1024 * 1024          # conservative (v7x per-TC) fallback
    budget = int(vmem_cap * 0.6)             # pipeline buffers + scratch target
    vmem_limit = int(min(vmem_cap, budget + (16 << 20)))

    # --- pixel-row tile T (each row = 128 pixels), bn = 1 footprint -------------
    # per T-row: 2 inputs x 2 pipeline buffers x c x 128 x itemsize + f32 acc row.
    per_row = 4 * c * 128 * itemsize + 128 * 4
    t_budget = max(1, budget // per_row)
    if hw128 <= t_budget:
        t_rows = hw128                        # full extent: no (8,) constraint
    else:
        t_rows = max(16, (t_budget // 8) * 8)  # >=2048 lanes => >= ~1 MiB DMAs
    need_mask = (hw128 % t_rows) != 0
    n_tiles = pl.cdiv(hw128, t_rows)

    # --- batch-block size bn: amortize per-step overhead for small images -------
    bn = 1
    if t_rows == hw128 and n > 1:
        per_n_vmem = 4 * c * t_rows * 128 * itemsize + t_rows * 128 * 4
        bn_vmem = max(1, budget // per_n_vmem)
        bytes_per_n = 2 * c * t_rows * 128 * itemsize
        bn_dma = max(1, (2 << 20) // max(1, bytes_per_n))   # ~2 MiB per step
        bn_cap = int(min(n, bn_vmem, bn_dma))
        bn = max(d for d in range(1, bn_cap + 1) if n % d == 0)
    nb = n // bn

    partials = pl.pallas_call(
        functools.partial(
            _l2_loss_kernel, hw128=hw128, t_rows=t_rows, need_mask=need_mask
        ),
        out_shape=jax.ShapeDtypeStruct((nb, 1, 1), jnp.float32),
        grid_spec=pltpu.PrefetchScalarGridSpec(
            num_scalar_prefetch=0,
            grid=(nb, n_tiles),
            in_specs=[
                pl.BlockSpec((bn, c, t_rows, 128), lambda i, j: (i, 0, j, 0)),
                pl.BlockSpec((bn, c, t_rows, 128), lambda i, j: (i, 0, j, 0)),
            ],
            out_specs=pl.BlockSpec((1, 1, 1), lambda i, j: (i, 0, 0)),
            scratch_shapes=[pltpu.VMEM((bn, t_rows, 128), jnp.float32)],
        ),
        compiler_params=pltpu.CompilerParams(
            # Batch axis -> "parallel" (megacore / dual-TC on v7x);
            # pixel-row axis is the reduction -> "arbitrary", innermost.
            dimension_semantics=("parallel", "arbitrary"),
            vmem_limit_bytes=vmem_limit,
        ),
    )(o4, t4)

    # Tiny final reduction + mean outside the kernel.
    return jnp.sum(partials) / total


if __name__ == "__main__":
    key = jax.random.PRNGKey(0)
    k1, k2 = jax.random.split(key)

    # Small optical-flow-like shapes: batch=2, channels=4, spatial=16x16.
    output = jax.random.normal(k1, (2, 4, 16, 16), dtype=jnp.float32)
    target = jax.random.normal(k2, (2, 4, 16, 16), dtype=jnp.float32)

    loss = jax.block_until_ready(jax.jit(l2_loss)(output, target))

    # Pure-JAX reference of the PyTorch semantics.
    ref = jnp.mean(jnp.sqrt(jnp.sum((output - target) ** 2, axis=1)))
    assert jnp.allclose(loss, ref, rtol=1e-5, atol=1e-5), (loss, ref)

    print("KERNEL_OK")
</pallas_src>

<mosaic_0001>
module attributes {stable_mosaic.version = 11 : i64} {
  func.func @_l2_loss_kernel(%arg0: i32, %arg1: i32, %arg2: memref<2x4x2x128xf32, #tpu.memory_space<vmem>>, %arg3: memref<2x4x2x128xf32, #tpu.memory_space<vmem>>, %arg4: memref<1x1x1xf32, #tpu.memory_space<vmem>>, %arg5: memref<2x2x128xf32, #tpu.memory_space<vmem>>) attributes {dimension_semantics = [#tpu.dimension_semantics<parallel>, #tpu.dimension_semantics<arbitrary>], iteration_bounds = array<i64: 1, 1>, scalar_prefetch = 0 : i64, scratch_operands = 1 : i64, tpu.core_type = #tpu.core_type<tc>, window_params = [{transform_indices = @transform_0, window_bounds = array<i64: 2, 4, 2, 128>}, {transform_indices = @transform_1, window_bounds = array<i64: 2, 4, 2, 128>}, {transform_indices = @transform_2, window_bounds = array<i64: 1, 1, 1>}]} {
    %c0_i32 = arith.constant 0 : i32
    %0 = arith.cmpi eq, %arg1, %c0_i32 : i32
    %1 = arith.extui %0 : i1 to i32
    %c0_i32_0 = arith.constant 0 : i32
    %2 = arith.cmpi ne, %1, %c0_i32_0 : i32
    scf.if %2 {
      %cst_16 = arith.constant 0.000000e+00 : f32
      %15 = vector.broadcast %cst_16 : f32 to vector<2x2x128xf32>
      %c0_17 = arith.constant 0 : index
      %c0_18 = arith.constant 0 : index
      %c0_19 = arith.constant 0 : index
      %16 = vector.load %arg5[%c0_17, %c0_18, %c0_19] : memref<2x2x128xf32, #tpu.memory_space<vmem>>, vector<2x2x128xf32>
      tpu.vector_store %arg5[%c0_17, %c0_18, %c0_19], %15 {strides = array<i32>} : memref<2x2x128xf32, #tpu.memory_space<vmem>>, vector<2x2x128xf32>,
    } else {
    }
    %c0 = arith.constant 0 : index
    %c0_1 = arith.constant 0 : index
    %c0_2 = arith.constant 0 : index
    %c0_3 = arith.constant 0 : index
    %3 = vector.load %arg2[%c0, %c0_1, %c0_2, %c0_3] : memref<2x4x2x128xf32, #tpu.memory_space<vmem>>, vector<2x4x2x128xf32>
    %c0_4 = arith.constant 0 : index
    %c0_5 = arith.constant 0 : index
    %c0_6 = arith.constant 0 : index
    %c0_7 = arith.constant 0 : index
    %4 = vector.load %arg3[%c0_4, %c0_5, %c0_6, %c0_7] : memref<2x4x2x128xf32, #tpu.memory_space<vmem>>, vector<2x4x2x128xf32>
    %5 = arith.subf %3, %4 : vector<2x4x2x128xf32>
    %6 = arith.mulf %5, %5 : vector<2x4x2x128xf32>
    %cst = arith.constant dense<0.000000e+00> : vector<2x2x128xf32>
    %7 = vector.multi_reduction <add>, %6, %cst [1] : vector<2x4x2x128xf32> to vector<2x2x128xf32>
    %8 = math.sqrt %7 : vector<2x2x128xf32>
    %c0_8 = arith.constant 0 : index
    %c0_9 = arith.constant 0 : index
    %c0_10 = arith.constant 0 : index
    %9 = vector.load %arg5[%c0_8, %c0_9, %c0_10] : memref<2x2x128xf32, #tpu.memory_space<vmem>>, vector<2x2x128xf32>
    %10 = arith.addf %9, %8 : vector<2x2x128xf32>
    %c0_11 = arith.constant 0 : index
    %c0_12 = arith.constant 0 : index
    %c0_13 = arith.constant 0 : index
    %11 = vector.load %arg5[%c0_11, %c0_12, %c0_13] : memref<2x2x128xf32, #tpu.memory_space<vmem>>, vector<2x2x128xf32>
    tpu.vector_store %arg5[%c0_11, %c0_12, %c0_13], %10 {strides = array<i32>} : memref<2x2x128xf32, #tpu.memory_space<vmem>>, vector<2x2x128xf32>,
    %c0_i32_14 = arith.constant 0 : i32
    %12 = arith.cmpi eq, %arg1, %c0_i32_14 : i32
    %13 = arith.extui %12 : i1 to i32
    %c0_i32_15 = arith.constant 0 : i32
    %14 = arith.cmpi ne, %13, %c0_i32_15 : i32
    scf.if %14 {
      %c0_16 = arith.constant 0 : index
      %c0_17 = arith.constant 0 : index
      %c0_18 = arith.constant 0 : index
      %15 = vector.load %arg5[%c0_16, %c0_17, %c0_18] : memref<2x2x128xf32, #tpu.memory_space<vmem>>, vector<2x2x128xf32>
      %16 = vector.shape_cast %15 : vector<2x2x128xf32> to vector<1x2x2x128xf32>
      %cst_19 = arith.constant dense<0.000000e+00> : vector<1xf32>
      %17 = vector.multi_reduction <add>, %16, %cst_19 [1, 2, 3] : vector<1x2x2x128xf32> to vector<1xf32>
      %18 = vector.shape_cast %17 : vector<1xf32> to vector<1x1x1x1xf32>
      %19 = vector.extract %18[0, 0, 0, 0] : f32 from vector<1x1x1x1xf32>
      %20 = vector.broadcast %19 : f32 to vector<1x1x1xf32>
      %c0_20 = arith.constant 0 : index
      %c0_21 = arith.constant 0 : index
      %c0_22 = arith.constant 0 : index
      %21 = vector.load %arg4[%c0_20, %c0_21, %c0_22] : memref<1x1x1xf32, #tpu.memory_space<vmem>>, vector<1x1x1xf32>
      tpu.vector_store %arg4[%c0_20, %c0_21, %c0_22], %20 {strides = array<i32>} : memref<1x1x1xf32, #tpu.memory_space<vmem>>, vector<1x1x1xf32>,
    } else {
    }
    return
  }
  func.func @transform_0(%arg0: i32, %arg1: i32) -> (i32, i32, i32, i32) {
    %c0_i32 = arith.constant 0 : i32
    %c0_i32_0 = arith.constant 0 : i32
    %c0_i32_1 = arith.constant 0 : i32
    return %arg0, %c0_i32, %arg1, %c0_i32_0 : i32, i32, i32, i32
  }
  func.func @transform_1(%arg0: i32, %arg1: i32) -> (i32, i32, i32, i32) {
    %c0_i32 = arith.constant 0 : i32
    %c0_i32_0 = arith.constant 0 : i32
    %c0_i32_1 = arith.constant 0 : i32
    return %arg0, %c0_i32, %arg1, %c0_i32_0 : i32, i32, i32, i32
  }
  func.func @transform_2(%arg0: i32, %arg1: i32) -> (i32, i32, i32) {
    %c0_i32 = arith.constant 0 : i32
    %c0_i32_0 = arith.constant 0 : i32
    %c0_i32_1 = arith.constant 0 : i32
    return %arg0, %c0_i32, %c0_i32_0 : i32, i32, i32
  }
}

</mosaic_0001>

<llo_original>
// kernel: l2_loss.1
$region0: #{l2_loss.1}
  #allocation0 [shape = 'u32[]', space=smem, size = 0x4, offset = 0x4, fixed_abs, tag = 'smem constant byte address 0x4 - core index']
  #allocation1 [shape = 'u32[144,128]{1,0:T(1,128)}', space=vmem, size = 0x12000, scoped, tag = 'internal scratch']
  #allocation2 [shape = 'f32[2,2,128]{2,1,0:T(2,128)}', space=vmem, size = 0x800, scoped, tag = 'scratch operand']
  %s0 = inlined_call_operand.vmem [shape: f32[2,4,2,128], index: 0, kind: input, shape index: {}]
  %s1 = inlined_call_operand.vmem [shape: f32[2,4,2,128], index: 1, kind: input, shape index: {}]
  %s2 = inlined_call_operand.hbm [shape: f32[1,1,1], index: 2, kind: output, shape index: {}]
  %s3 = sld [smem:[#allocation0]]
  $region26: #{l2_loss.1} parent=0
    _
  %s5 = ssub.s32 1, %s3
  %s6 = scalar_select 0, %s5, %s3
  $region1: #{l2_loss.1} parent=0
    #allocation3 [shape = 'u8[512]{0}', space=vmem, size = 0x400, scoped, tag = 'output window, operand 0, single buffered']
    #allocation4 [shape = 's32[1]{0}', space=sflag, size = 0x4, scoped, tag = 'scoped memory for l2_loss.1']
    %7 = vsyncpa [#allocation4], 0
    // Predicated region
    $region2: #{l2_loss.1} parent=1 // pred_check
      _
    $region3: #{l2_loss.1} parent=1 // pred_check_branch
      %9 = sbr.rel (0) target = $region5
    $region4: #{l2_loss.1} parent=1 // pred_region
      _
    $region5: #{l2_loss.1} parent=1 // pred_fallthru
      _
    // Predicated region
    $region6: #{l2_loss.1} parent=1 // pred_check
      _
    $region7: #{l2_loss.1} parent=1 // pred_check_branch
      %11 = sbr.rel (0) target = $region9
    $region8: #{l2_loss.1} parent=1 // pred_region
      _
    $region9: #{l2_loss.1} parent=1 // pred_fallthru
      _
    %p12 = scmp.eq.s32.totalorder 0, 0
    // Predicated region
    $region10: #{l2_loss.1} parent=1 // pred_check
      %p13 = pneg %p12
    $region11: #{l2_loss.1} parent=1 // pred_check_branch
      %15 = sbr.rel (%p13) target = $region13
    $region12: #{l2_loss.1} parent=1 // pred_region
      %16 = vst [vmem:[#allocation2] sm:$0x3] 0.0
      %17 = vst [vmem:[#allocation2 + $0x2] sm:$0x3] 0.0
    $region13: #{l2_loss.1} parent=1 // pred_fallthru
      _
    %v18 = vld [vmem:[%s0] sm:$0x3]
    %v19 = vld [vmem:[%s0 + $0x2] sm:$0x3]
    %v20 = vld [vmem:[%s0 + $0x4] sm:$0x3]
    %v21 = vld [vmem:[%s0 + $0x6] sm:$0x3]
    %v22 = vld [vmem:[%s0 + $0x8] sm:$0x3]
    %v23 = vld [vmem:[%s0 + $0xa] sm:$0x3]
    %v24 = vld [vmem:[%s0 + $0xc] sm:$0x3]
    %v25 = vld [vmem:[%s0 + $0xe] sm:$0x3]
    %v26 = vld [vmem:[%s1] sm:$0x3]
    %v27 = vld [vmem:[%s1 + $0x2] sm:$0x3]
    %v28 = vld [vmem:[%s1 + $0x4] sm:$0x3]
    %v29 = vld [vmem:[%s1 + $0x6] sm:$0x3]
    %v30 = vld [vmem:[%s1 + $0x8] sm:$0x3]
    %v31 = vld [vmem:[%s1 + $0xa] sm:$0x3]
    %v32 = vld [vmem:[%s1 + $0xc] sm:$0x3]
    %v33 = vld [vmem:[%s1 + $0xe] sm:$0x3]
    %v34 = vsub.f32 %v18, %v26
    %v35 = vsub.f32 %v19, %v27
    %v36 = vsub.f32 %v20, %v28
    %v37 = vsub.f32 %v21, %v29
    %v38 = vsub.f32 %v22, %v30
    %v39 = vsub.f32 %v23, %v31
    %v40 = vsub.f32 %v24, %v32
    %v41 = vsub.f32 %v25, %v33
    %v42 = vmul.f32 %v34, %v34
    %v43 = vmul.f32 %v35, %v35
    %v44 = vmul.f32 %v36, %v36
    %v45 = vmul.f32 %v37, %v37
    %v46 = vmul.f32 %v38, %v38
    %v47 = vmul.f32 %v39, %v39
    %v48 = vmul.f32 %v40, %v40
    %v49 = vmul.f32 %v41, %v41
    %vm50 = vcmask 1041408
    %v51 = vsel %vm50, %v42, 0.0
    %v52 = vsel %vm50, %v43, 0.0
    %v53 = vadd.f32 %v51, %v52
    %v54 = vsel %vm50, %v44, 0.0
    %v55 = vadd.f32 %v53, %v54
    %v56 = vsel %vm50, %v45, 0.0
    %v57 = vadd.f32 %v55, %v56
    %v58 = vsel %vm50, %v46, 0.0
    %v59 = vsel %vm50, %v47, 0.0
    %v60 = vadd.f32 %v58, %v59
    %v61 = vsel %vm50, %v48, 0.0
    %v62 = vadd.f32 %v60, %v61
    %v63 = vsel %vm50, %v49, 0.0
    %v64 = vadd.f32 %v62, %v63
    %v65 = vrsqrt.pop %v57
    %v66 = vmul.f32 %v57, %v65
    %vm67 = vcmp.eq.f32.partialorder %v57, inf
    %v68 = vsel %vm67, %v57, %v66
    %vm69 = vcmp.eq.f32.partialorder %v57, 0.0
    %v70 = vand.u32 %v57, 2147483648
    %v71 = vsel %vm69, %v70, %v68
    %v72 = vrsqrt.pop %v64
    %v73 = vmul.f32 %v64, %v72
    %vm74 = vcmp.eq.f32.partialorder %v64, inf
    %v75 = vsel %vm74, %v64, %v73
    %vm76 = vcmp.eq.f32.partialorder %v64, 0.0
    %v77 = vand.u32 %v64, 2147483648
    %v78 = vsel %vm76, %v77, %v75
    %v79 = vld [vmem:[#allocation2] sm:$0x3]
    %v80 = vld [vmem:[#allocation2 + $0x2] sm:$0x3]
    %v81 = vadd.f32 %v79, %v71
    %v82 = vadd.f32 %v80, %v78
    %83 = vst [vmem:[#allocation2] sm:$0x3] %v81
    %84 = vst [vmem:[#allocation2 + $0x2] sm:$0x3] %v82
    // Predicated region
    $region14: #{l2_loss.1} parent=1 // pred_check
      %p85 = pneg %p12
    $region15: #{l2_loss.1} parent=1 // pred_check_branch
      %87 = sbr.rel (%p85) target = $region17
    $region16: #{l2_loss.1} parent=1 // pred_region
      %v88 = vld [vmem:[#allocation2] sm:$0x3]
      %v89 = vld [vmem:[#allocation2 + $0x2] sm:$0x3]
      %v90 = vsel %vm50, %v88, 0.0
      %v91 = vsel %vm50, %v89, 0.0
      %v92 = vadd.f32 %v90, %v91
      %93 = vadd.xlane.f32.xlu0 %v92
      %v94 = vpop.xlane.xlu0 %93
      %v95 = vrot.slane %v94, 4
      %v96 = vadd.f32 %v94, %v95
      %v97 = vrot.slane %v96, 2
      %v98 = vadd.f32 %v96, %v97
      %v99 = vrot.slane %v98, 1
      %v100 = vadd.f32 %v98, %v99
      %s101 = vtos %v100
      %v102 = vstv %s101
      %vm103 = vcmask 0
      %104 = vst.msk [vmem:[#allocation3] sm:$0x1] %vm103, %v102
    $region17: #{l2_loss.1} parent=1 // pred_fallthru
      _
    // Predicated region
    $region18: #{l2_loss.1} parent=1 // pred_check
      _
    $region19: #{l2_loss.1} parent=1 // pred_check_branch
      %106 = sbr.rel (0) target = $region21
    $region20: #{l2_loss.1} parent=1 // pred_region
      %s108 = ssub.s32 16, 16
      %109 = vsyncadd [#allocation4], %s108
      %s111 = sshll.u32 [#allocation3], 4
      %s112 = int_to_ptr.vmem [resolvable:$true] %s111
      %114 = dma.vmem_to_hbm [thread:$0]  %s112, 16, %s2, [#allocation4]
    $region21: #{l2_loss.1} parent=1 // pred_fallthru
      _
    // Predicated region
    $region22: #{l2_loss.1} parent=1 // pred_check
      _
    $region23: #{l2_loss.1} parent=1 // pred_check_branch
      %116 = sbr.rel (0) target = $region25
    $region24: #{l2_loss.1} parent=1 // pred_region
      %117 = dma.done [#allocation4], 16
    $region25: #{l2_loss.1} parent=1 // pred_fallthru
      _
    %118 = vsyncpa [#allocation4], 1

</llo_original>
